<compile_context>
chip_gen: v5e
topology: v5e:2x2
jax: 0.10.0
libtpu: 0.0.40
codegen_flags: <defaults>
</compile_context>

<pallas_src>
import jax
import jax.numpy as jnp
from jax.experimental import pallas as pl
from jax.experimental.pallas import tpu as pltpu

LEAKY_SLOPE = 0.01
BN_EPS = 1e-5
_VMEM_LIMIT = 32 * 1024 * 1024      # scoped-VMEM budget; v7x-safe (64 MiB physical)


def _round_up(x, m):
    return (x + m - 1) // m * m


def _cdiv(a, b):
    return -(-a // b)


def _pick_spatial_tile(s128, cap=1024):
    """Balanced lane tiling: fewest tiles with TS <= cap, minimal padding.

    Returns (TS, n_tiles), TS a multiple of 128, TS * n_tiles >= s128.
    Avoids the degenerate 128-lane fallback: per-grid-step overhead (~0.35us)
    dominates when K/Cout are tiny; >=512-lane tiles reach ~85% of HBM roofline.
    """
    n_min = max(1, _cdiv(s128, cap))
    n_max = max(n_min, s128 // 128)
    best = None
    for n in range(n_min, min(n_max, n_min + 4) + 1):
        ts = _round_up(_cdiv(s128, n), 128)
        pad = ts * n - s128
        if best is None or pad < best[0]:
            best = (pad, ts, n)
        if pad == 0:
            break
    _, ts, n = best
    return ts, n


# ---------------------------------------------------------------------------
# Pass 1: per-(batch, channel) sum / sum-of-squares of both conv branches.
# ---------------------------------------------------------------------------
def _stats_kernel(p_ref, ws_ref, sum_ref, sq_ref):
    # y^T = Ws @ P : (2*Cout, TS) f32.  Rows [0:Cout] = 3x3 branch,
    # rows [Cout:2*Cout] = 1x1 branch (weights embedded at the centre tap).
    y = jnp.dot(ws_ref[...], p_ref[...], preferred_element_type=jnp.float32)

    @pl.when(pl.program_id(1) == 0)        # first spatial tile of this batch
    def _():
        sum_ref[...] = jnp.zeros_like(sum_ref)
        sq_ref[...] = jnp.zeros_like(sq_ref)

    sum_ref[...] += jnp.sum(y, axis=1, keepdims=True)
    sq_ref[...] += jnp.sum(y * y, axis=1, keepdims=True)


# ---------------------------------------------------------------------------
# Pass 2: combined matmul (both branches + both BN affines folded into one
# weight matrix / shift) + LeakyReLU, lane-dense NCHW output.
# ---------------------------------------------------------------------------
def _apply_kernel(p_ref, wc_ref, t_ref, o_ref):
    y = jnp.dot(wc_ref[...], p_ref[...], preferred_element_type=jnp.float32)
    y = y + t_ref[...]                       # (Cout, 1) broadcast over lanes
    o_ref[...] = jnp.where(y >= 0, y, LEAKY_SLOPE * y).astype(o_ref.dtype)


def head_conv(x_nchw, w3, bc3, g3, be3, w1, bc1, g1, be1, out_dtype=jnp.float32):
    """HeadConv forward. x_nchw: (N, Cin, H, W) f32 -> (N, Cout, Ho, Wo) out_dtype.

    bc3 / bc1 (conv biases) are accepted for interface parity but unused:
    a per-channel additive bias cancels exactly under training-mode BatchNorm.
    """
    del bc3, bc1
    N, Cin, H, W = x_nchw.shape
    Cout = w3.shape[0]
    Ho = (H + 2 - 3) // 2 + 1            # 3x3, stride 2, pad 1
    Wo = (W + 2 - 3) // 2 + 1            # == 1x1/s2 output size
    S = Ho * Wo
    K = 9 * Cin

    S128 = _round_up(max(S, 128), 128)
    TS, n_s_tiles = _pick_spatial_tile(S128)
    S_pad = TS * n_s_tiles

    # ---- im2col in NCHW and in bf16 (cast BEFORE the taps so XLA never builds
    # an f32 (N, K, S_pad) slab): P[n, (kh*3+kw)*Cin + c, ho*Wo + wo] -----------
    xp = jnp.pad(x_nchw.astype(jnp.bfloat16), ((0, 0), (0, 0), (1, 1), (1, 1)))
    taps = []
    for kh in range(3):
        for kw in range(3):
            t = jax.lax.slice(
                xp, (0, 0, kh, kw),
                (N, Cin, kh + 2 * (Ho - 1) + 1, kw + 2 * (Wo - 1) + 1),
                (1, 1, 2, 2))
            taps.append(t.reshape(N, Cin, S))
    p = jnp.concatenate(taps, axis=1)                         # (N, K, S) bf16
    p = jnp.pad(p, ((0, 0), (0, 0), (0, S_pad - S)))          # zero-pad lanes

    # ---- weights in the (Cout, K) "y^T = W @ P" layout ------------------------
    w3m = jnp.transpose(w3, (0, 2, 3, 1)).reshape(Cout, K)            # f32
    w1e = jnp.zeros((Cout, K), jnp.float32)
    w1e = w1e.at[:, 4 * Cin:5 * Cin].set(w1[:, :, 0, 0])              # centre tap
    ws = jnp.concatenate([w3m, w1e], axis=0).astype(jnp.bfloat16)     # (2*Cout, K)

    # ---- explicit VMEM budget check (double-buffered tiles) -------------------
    out_bytes = jnp.dtype(out_dtype).itemsize
    vmem_est = 2 * (K * TS * 2                               # P tile (bf16)
                    + max(Cout * TS * out_bytes,             # pass-2 output tile
                          2 * (2 * Cout) * 4)                # pass-1 stats tiles
                    + (2 * Cout) * K * 2                     # weights
                    + Cout * 4)                              # shift
    assert vmem_est < _VMEM_LIMIT, (vmem_est, _VMEM_LIMIT)

    cparams_stats = pltpu.CompilerParams(
        # Batch axis "parallel": per-batch partial sums make pass 1 shardable
        # across both v7x TensorCores.  Spatial axis "arbitrary": resident
        # accumulator (reduction axis innermost).
        dimension_semantics=("parallel", "arbitrary"),
        vmem_limit_bytes=_VMEM_LIMIT)
    cparams_apply = pltpu.CompilerParams(
        dimension_semantics=("parallel", "parallel"),        # megacore on v7x
        vmem_limit_bytes=_VMEM_LIMIT)

    # ---- pass 1: per-(batch, channel) sums over Ho*Wo -------------------------
    sums, sqs = pl.pallas_call(
        _stats_kernel,
        out_shape=(jax.ShapeDtypeStruct((N, 2 * Cout, 1), jnp.float32),
                   jax.ShapeDtypeStruct((N, 2 * Cout, 1), jnp.float32)),
        grid=(N, n_s_tiles),
        in_specs=[
            pl.BlockSpec((None, K, TS), lambda n, j: (n, 0, j)),
            pl.BlockSpec((2 * Cout, K), lambda n, j: (0, 0)),
        ],
        out_specs=(pl.BlockSpec((None, 2 * Cout, 1), lambda n, j: (n, 0, 0)),
                   pl.BlockSpec((None, 2 * Cout, 1), lambda n, j: (n, 0, 0))),
        compiler_params=cparams_stats,
    )(p, ws)

    # ---- glue: fold BN (training-mode batch stats, biased var) into one
    #            combined weight + per-channel shift ----------------------------
    m = jnp.float32(N * S)          # true population; zero-padded lanes add 0
    mu = jnp.sum(sums[:, :, 0], axis=0) / m                  # (2*Cout,)
    ex2 = jnp.sum(sqs[:, :, 0], axis=0) / m
    var = jnp.maximum(ex2 - mu * mu, 0.0)                    # guard cancellation
    mu3, mu1 = mu[:Cout], mu[Cout:]
    var3, var1 = var[:Cout], var[Cout:]
    s3 = g3 * jax.lax.rsqrt(var3 + BN_EPS)
    s1 = g1 * jax.lax.rsqrt(var1 + BN_EPS)
    tshift = (be3 - mu3 * s3) + (be1 - mu1 * s1)                       # (Cout,)
    wc = (s3[:, None] * w3m + s1[:, None] * w1e).astype(jnp.bfloat16)  # (Cout, K)

    # ---- pass 2: combined matmul + shift + LeakyReLU --------------------------
    out = pl.pallas_call(
        _apply_kernel,
        out_shape=jax.ShapeDtypeStruct((N, Cout, S_pad), out_dtype),
        grid=(N, n_s_tiles),
        in_specs=[
            pl.BlockSpec((None, K, TS), lambda n, j: (n, 0, j)),
            pl.BlockSpec((Cout, K), lambda n, j: (0, 0)),
            pl.BlockSpec((Cout, 1), lambda n, j: (0, 0)),
        ],
        out_specs=pl.BlockSpec((None, Cout, TS), lambda n, j: (n, 0, j)),
        compiler_params=cparams_apply,
    )(p, wc, tshift.reshape(Cout, 1))

    # drop spatial padding; already NCHW
    return out[:, :, :S].reshape(N, Cout, Ho, Wo)


# ---------------------------------------------------------------------------
# Pure-JAX reference mirroring the PyTorch forward (training-mode BN), f32.
# ---------------------------------------------------------------------------
def reference(x, w3, bc3, g3, be3, w1, bc1, g1, be1):
    dn = ('NCHW', 'OIHW', 'NCHW')
    y3 = jax.lax.conv_general_dilated(x, w3, (2, 2), ((1, 1), (1, 1)),
                                      dimension_numbers=dn) + bc3[None, :, None, None]
    y1 = jax.lax.conv_general_dilated(x, w1, (2, 2), 'VALID',
                                      dimension_numbers=dn) + bc1[None, :, None, None]

    def bn(y, g, b):
        mu = jnp.mean(y, axis=(0, 2, 3), keepdims=True)
        var = jnp.mean((y - mu) ** 2, axis=(0, 2, 3), keepdims=True)
        return ((y - mu) * jax.lax.rsqrt(var + BN_EPS) * g[None, :, None, None]
                + b[None, :, None, None])

    y = bn(y3, g3, be3) + bn(y1, g1, be1)
    return jnp.where(y >= 0, y, LEAKY_SLOPE * y)


if __name__ == "__main__":
    N, Cin, H, W, Cout = 2, 4, 16, 16, 8
    keys = jax.random.split(jax.random.PRNGKey(0), 10)

    x = jax.random.normal(keys[0], (N, Cin, H, W), jnp.float32)

    # Deterministic synthetic parameters (shapes per HeadConv.__init__).
    w3 = 0.1 * jax.random.normal(keys[1], (Cout, Cin, 3, 3), jnp.float32)
    bc3 = 0.1 * jax.random.normal(keys[2], (Cout,), jnp.float32)
    g3 = 1.0 + 0.1 * jax.random.normal(keys[3], (Cout,), jnp.float32)
    be3 = 0.1 * jax.random.normal(keys[4], (Cout,), jnp.float32)

    w1 = 0.1 * jax.random.normal(keys[5], (Cout, Cin, 1, 1), jnp.float32)
    bc1 = 0.1 * jax.random.normal(keys[6], (Cout,), jnp.float32)
    g1 = 1.0 + 0.1 * jax.random.normal(keys[7], (Cout,), jnp.float32)
    be1 = 0.1 * jax.random.normal(keys[8], (Cout,), jnp.float32)

    out = jax.jit(head_conv)(x, w3, bc3, g3, be3, w1, bc1, g1, be1)
    out = jax.block_until_ready(out)

    ref = reference(x, w3, bc3, g3, be3, w1, bc1, g1, be1)
    assert out.shape == (N, Cout, H // 2, W // 2)
    # bf16 patches/weights (f32 accumulation) => looser tolerance than pure f32.
    err = float(jnp.max(jnp.abs(out - ref)))
    assert err < 5e-2, err

    print("KERNEL_OK")
</pallas_src>

<mosaic_0001>
module attributes {stable_mosaic.version = 11 : i64} {
  func.func @_stats_kernel(%arg0: i32, %arg1: i32, %arg2: memref<1x36x128xbf16, #tpu.memory_space<vmem>>, %arg3: memref<16x36xbf16, #tpu.memory_space<vmem>>, %arg4: memref<1x16x1xf32, #tpu.memory_space<vmem>>, %arg5: memref<1x16x1xf32, #tpu.memory_space<vmem>>) attributes {dimension_semantics = [#tpu.dimension_semantics<parallel>, #tpu.dimension_semantics<arbitrary>], iteration_bounds = array<i64: 2, 1>, scalar_prefetch = 0 : i64, scratch_operands = 0 : i64, tpu.core_type = #tpu.core_type<tc>, window_params = [{transform_indices = @transform_0, window_bounds = array<i64: 1, 36, 128>}, {pipeline_mode = #tpu.pipeline_mode<synchronous>, transform_indices = @transform_1, window_bounds = array<i64: 16, 36>}, {transform_indices = @transform_2, window_bounds = array<i64: 1, 16, 1>}, {transform_indices = @transform_3, window_bounds = array<i64: 1, 16, 1>}]} {
    %c0 = arith.constant 0 : index
    %c0_0 = arith.constant 0 : index
    %0 = vector.load %arg3[%c0, %c0_0] : memref<16x36xbf16, #tpu.memory_space<vmem>>, vector<16x36xbf16>
    %c0_1 = arith.constant 0 : index
    %c0_2 = arith.constant 0 : index
    %c0_3 = arith.constant 0 : index
    %1 = vector.load %arg2[%c0_1, %c0_2, %c0_3] : memref<1x36x128xbf16, #tpu.memory_space<vmem>>, vector<1x36x128xbf16>
    %2 = vector.shape_cast %1 : vector<1x36x128xbf16> to vector<36x128xbf16>
    %cst = arith.constant dense<0.000000e+00> : vector<16x128xf32>
    %3 = tpu.matmul %0, %2, %cst {dimension_numbers = #tpu.dot_dimension_numbers<[1], [0], [0], [1], [0, 0, 1, 1], [], []>} : vector<16x36xbf16>, vector<36x128xbf16>, vector<16x128xf32> -> vector<16x128xf32>
    %c0_i32 = arith.constant 0 : i32
    %4 = arith.cmpi eq, %arg1, %c0_i32 : i32
    %5 = arith.extui %4 : i1 to i32
    %c0_i32_4 = arith.constant 0 : i32
    %6 = arith.cmpi ne, %5, %c0_i32_4 : i32
    scf.if %6 {
      %cst_19 = arith.constant 0.000000e+00 : f32
      %24 = vector.broadcast %cst_19 : f32 to vector<16x1xf32>
      %c0_20 = arith.constant 0 : index
      %c0_21 = arith.constant 0 : index
      %c0_22 = arith.constant 0 : index
      %25 = vector.load %arg4[%c0_20, %c0_21, %c0_22] : memref<1x16x1xf32, #tpu.memory_space<vmem>>, vector<1x16x1xf32>
      %26 = vector.shape_cast %25 : vector<1x16x1xf32> to vector<16x1xf32>
      %27 = vector.shape_cast %24 : vector<16x1xf32> to vector<1x16x1xf32>
      tpu.vector_store %arg4[%c0_20, %c0_21, %c0_22], %27 {strides = array<i32>} : memref<1x16x1xf32, #tpu.memory_space<vmem>>, vector<1x16x1xf32>,
      %cst_23 = arith.constant 0.000000e+00 : f32
      %28 = vector.broadcast %cst_23 : f32 to vector<16x1xf32>
      %c0_24 = arith.constant 0 : index
      %c0_25 = arith.constant 0 : index
      %c0_26 = arith.constant 0 : index
      %29 = vector.load %arg5[%c0_24, %c0_25, %c0_26] : memref<1x16x1xf32, #tpu.memory_space<vmem>>, vector<1x16x1xf32>
      %30 = vector.shape_cast %29 : vector<1x16x1xf32> to vector<16x1xf32>
      %31 = vector.shape_cast %28 : vector<16x1xf32> to vector<1x16x1xf32>
      tpu.vector_store %arg5[%c0_24, %c0_25, %c0_26], %31 {strides = array<i32>} : memref<1x16x1xf32, #tpu.memory_space<vmem>>, vector<1x16x1xf32>,
    } else {
    }
    %c0_5 = arith.constant 0 : index
    %c0_6 = arith.constant 0 : index
    %c0_7 = arith.constant 0 : index
    %7 = vector.load %arg4[%c0_5, %c0_6, %c0_7] : memref<1x16x1xf32, #tpu.memory_space<vmem>>, vector<1x16x1xf32>
    %8 = vector.shape_cast %7 : vector<1x16x1xf32> to vector<16x1xf32>
    %cst_8 = arith.constant dense<0.000000e+00> : vector<16xf32>
    %9 = vector.multi_reduction <add>, %3, %cst_8 [1] : vector<16x128xf32> to vector<16xf32>
    %10 = vector.shape_cast %9 : vector<16xf32> to vector<16x1xf32>
    %11 = arith.addf %8, %10 : vector<16x1xf32>
    %c0_9 = arith.constant 0 : index
    %c0_10 = arith.constant 0 : index
    %c0_11 = arith.constant 0 : index
    %12 = vector.load %arg4[%c0_9, %c0_10, %c0_11] : memref<1x16x1xf32, #tpu.memory_space<vmem>>, vector<1x16x1xf32>
    %13 = vector.shape_cast %12 : vector<1x16x1xf32> to vector<16x1xf32>
    %14 = vector.shape_cast %11 : vector<16x1xf32> to vector<1x16x1xf32>
    tpu.vector_store %arg4[%c0_9, %c0_10, %c0_11], %14 {strides = array<i32>} : memref<1x16x1xf32, #tpu.memory_space<vmem>>, vector<1x16x1xf32>,
    %c0_12 = arith.constant 0 : index
    %c0_13 = arith.constant 0 : index
    %c0_14 = arith.constant 0 : index
    %15 = vector.load %arg5[%c0_12, %c0_13, %c0_14] : memref<1x16x1xf32, #tpu.memory_space<vmem>>, vector<1x16x1xf32>
    %16 = vector.shape_cast %15 : vector<1x16x1xf32> to vector<16x1xf32>
    %17 = arith.mulf %3, %3 : vector<16x128xf32>
    %cst_15 = arith.constant dense<0.000000e+00> : vector<16xf32>
    %18 = vector.multi_reduction <add>, %17, %cst_15 [1] : vector<16x128xf32> to vector<16xf32>
    %19 = vector.shape_cast %18 : vector<16xf32> to vector<16x1xf32>
    %20 = arith.addf %16, %19 : vector<16x1xf32>
    %c0_16 = arith.constant 0 : index
    %c0_17 = arith.constant 0 : index
    %c0_18 = arith.constant 0 : index
    %21 = vector.load %arg5[%c0_16, %c0_17, %c0_18] : memref<1x16x1xf32, #tpu.memory_space<vmem>>, vector<1x16x1xf32>
    %22 = vector.shape_cast %21 : vector<1x16x1xf32> to vector<16x1xf32>
    %23 = vector.shape_cast %20 : vector<16x1xf32> to vector<1x16x1xf32>
    tpu.vector_store %arg5[%c0_16, %c0_17, %c0_18], %23 {strides = array<i32>} : memref<1x16x1xf32, #tpu.memory_space<vmem>>, vector<1x16x1xf32>,
    return
  }
  func.func @transform_0(%arg0: i32, %arg1: i32) -> (i32, i32, i32) {
    %c0_i32 = arith.constant 0 : i32
    %c0_i32_0 = arith.constant 0 : i32
    return %arg0, %c0_i32, %arg1 : i32, i32, i32
  }
  func.func @transform_1(%arg0: i32, %arg1: i32) -> (i32, i32) {
    %c0_i32 = arith.constant 0 : i32
    %c0_i32_0 = arith.constant 0 : i32
    %c0_i32_1 = arith.constant 0 : i32
    return %c0_i32, %c0_i32_0 : i32, i32
  }
  func.func @transform_2(%arg0: i32, %arg1: i32) -> (i32, i32, i32) {
    %c0_i32 = arith.constant 0 : i32
    %c0_i32_0 = arith.constant 0 : i32
    %c0_i32_1 = arith.constant 0 : i32
    return %arg0, %c0_i32, %c0_i32_0 : i32, i32, i32
  }
  func.func @transform_3(%arg0: i32, %arg1: i32) -> (i32, i32, i32) {
    %c0_i32 = arith.constant 0 : i32
    %c0_i32_0 = arith.constant 0 : i32
    %c0_i32_1 = arith.constant 0 : i32
    return %arg0, %c0_i32, %c0_i32_0 : i32, i32, i32
  }
}

module attributes {stable_mosaic.version = 11 : i64} {
  func.func @_apply_kernel(%arg0: i32, %arg1: i32, %arg2: memref<1x36x128xbf16, #tpu.memory_space<vmem>>, %arg3: memref<8x36xbf16, #tpu.memory_space<vmem>>, %arg4: memref<8x1xf32, #tpu.memory_space<vmem>>, %arg5: memref<1x8x128xf32, #tpu.memory_space<vmem>>) attributes {dimension_semantics = [#tpu.dimension_semantics<parallel>, #tpu.dimension_semantics<parallel>], iteration_bounds = array<i64: 2, 1>, scalar_prefetch = 0 : i64, scratch_operands = 0 : i64, tpu.core_type = #tpu.core_type<tc>, window_params = [{transform_indices = @transform_0, window_bounds = array<i64: 1, 36, 128>}, {pipeline_mode = #tpu.pipeline_mode<synchronous>, transform_indices = @transform_1, window_bounds = array<i64: 8, 36>}, {pipeline_mode = #tpu.pipeline_mode<synchronous>, transform_indices = @transform_2, window_bounds = array<i64: 8, 1>}, {transform_indices = @transform_3, window_bounds = array<i64: 1, 8, 128>}]} {
    %c0 = arith.constant 0 : index
    %c0_0 = arith.constant 0 : index
    %0 = vector.load %arg3[%c0, %c0_0] : memref<8x36xbf16, #tpu.memory_space<vmem>>, vector<8x36xbf16>
    %c0_1 = arith.constant 0 : index
    %c0_2 = arith.constant 0 : index
    %c0_3 = arith.constant 0 : index
    %1 = vector.load %arg2[%c0_1, %c0_2, %c0_3] : memref<1x36x128xbf16, #tpu.memory_space<vmem>>, vector<1x36x128xbf16>
    %2 = vector.shape_cast %1 : vector<1x36x128xbf16> to vector<36x128xbf16>
    %cst = arith.constant dense<0.000000e+00> : vector<8x128xf32>
    %3 = tpu.matmul %0, %2, %cst {dimension_numbers = #tpu.dot_dimension_numbers<[1], [0], [0], [1], [0, 0, 1, 1], [], []>} : vector<8x36xbf16>, vector<36x128xbf16>, vector<8x128xf32> -> vector<8x128xf32>
    %c0_4 = arith.constant 0 : index
    %c0_5 = arith.constant 0 : index
    %4 = vector.load %arg4[%c0_4, %c0_5] : memref<8x1xf32, #tpu.memory_space<vmem>>, vector<8x1xf32>
    %5 = vector.broadcast %4 : vector<8x1xf32> to vector<8x128xf32>
    %6 = arith.addf %3, %5 : vector<8x128xf32>
    %cst_6 = arith.constant 0.000000e+00 : f32
    %7 = vector.broadcast %cst_6 : f32 to vector<8x128xf32>
    %8 = arith.cmpf oge, %6, %7 : vector<8x128xf32>
    %cst_7 = arith.constant 0.00999999977 : f32
    %9 = vector.broadcast %cst_7 : f32 to vector<8x128xf32>
    %10 = arith.mulf %9, %6 : vector<8x128xf32>
    %11 = arith.select %8, %6, %10 : vector<8x128xi1>, vector<8x128xf32>
    %c0_8 = arith.constant 0 : index
    %c0_9 = arith.constant 0 : index
    %c0_10 = arith.constant 0 : index
    %12 = vector.load %arg5[%c0_8, %c0_9, %c0_10] : memref<1x8x128xf32, #tpu.memory_space<vmem>>, vector<1x8x128xf32>
    %13 = vector.shape_cast %12 : vector<1x8x128xf32> to vector<8x128xf32>
    %14 = vector.shape_cast %11 : vector<8x128xf32> to vector<1x8x128xf32>
    tpu.vector_store %arg5[%c0_8, %c0_9, %c0_10], %14 {strides = array<i32>} : memref<1x8x128xf32, #tpu.memory_space<vmem>>, vector<1x8x128xf32>,
    return
  }
  func.func @transform_0(%arg0: i32, %arg1: i32) -> (i32, i32, i32) {
    %c0_i32 = arith.constant 0 : i32
    %c0_i32_0 = arith.constant 0 : i32
    return %arg0, %c0_i32, %arg1 : i32, i32, i32
  }
  func.func @transform_1(%arg0: i32, %arg1: i32) -> (i32, i32) {
    %c0_i32 = arith.constant 0 : i32
    %c0_i32_0 = arith.constant 0 : i32
    %c0_i32_1 = arith.constant 0 : i32
    return %c0_i32, %c0_i32_0 : i32, i32
  }
  func.func @transform_2(%arg0: i32, %arg1: i32) -> (i32, i32) {
    %c0_i32 = arith.constant 0 : i32
    %c0_i32_0 = arith.constant 0 : i32
    %c0_i32_1 = arith.constant 0 : i32
    return %c0_i32, %c0_i32_0 : i32, i32
  }
  func.func @transform_3(%arg0: i32, %arg1: i32) -> (i32, i32, i32) {
    %c0_i32 = arith.constant 0 : i32
    %c0_i32_0 = arith.constant 0 : i32
    return %arg0, %c0_i32, %arg1 : i32, i32, i32
  }
}

</mosaic_0001>

<llo_original>
// kernel: head_conv.2
$region0: #{head_conv.2}
  #allocation0 [shape = 'u32[]', space=smem, size = 0x4, offset = 0x4, fixed_abs, tag = 'smem constant byte address 0x4 - core index']
  #allocation1 [shape = 'u32[72,128]{1,0:T(1,128)}', space=vmem, size = 0x9000, scoped, tag = 'internal scratch']
  %s0 = inlined_call_operand.vmem [shape: bf16[2,36,128], index: 0, kind: input, shape index: {}]
  %s1 = inlined_call_operand.vmem [shape: bf16[16,36], index: 1, kind: input, shape index: {}]
  %s2 = inlined_call_operand.vmem [shape: f32[2,16,1], index: 2, kind: output, shape index: {0}]
  %s3 = inlined_call_operand.vmem [shape: f32[2,16,1], index: 3, kind: output, shape index: {1}]
  %4 = xla_tuple %s2, %s3
  %s5 = sld [smem:[#allocation0]]
  $region53: #{head_conv.2} parent=0
    _
  %s7 = ssub.s32 1, %s5
  %s8 = scalar_select 0, %s7, %s5
  loop: start=0, step=1, limit=4
  $region2: #{head_conv.2} parent=0 // loop_pre_header
    _
  $region3: #{head_conv.2} parent=0 // loop_header
    %s10 = sphi 0, %s14
    %p11 = scmp.ge.s32.totalorder %s10, 4
    %s17 = sphi 0, %s29
    %s18 = sphi 0, %s25
    %s19 = sphi 0, %s17
    %s20 = sphi 0, %s18
    %s21 = sphi 0, %s19
    %s22 = sphi 0, %s20
    %s34 = sphi 0, %s36
    %s37 = sphi 0, %s34
    %s38 = sphi 0, %s37
    %s54 = sphi 0, %s38
    %s58 = sphi 0, %s58
    %s60 = sphi 0, %s58
    %s61 = sphi 0, %s60
    %s75 = sphi 0, %s61
    %s81 = sphi 0, %s83
    %s84 = sphi 0, %s81
    %s85 = sphi 0, %s84
    %s101 = sphi 0, %s85
    %s107 = sphi 0, %s109
    %s110 = sphi 0, %s107
    %s111 = sphi 0, %s110
    %s127 = sphi 0, %s111
  $region4: #{head_conv.2} parent=0 // loop_header_branch
    %13 = sbr.rel (%p11) target = $region8
  $region5: #{head_conv.2} parent=0 // loop_body
    %s15 = ssub.s32 %s10, 1
    %s16 = ssub.s32 %s10, 2
    %s23 = sadd.s32 1, %s18
    %p24 = scmp.ge.s32.totalorder %s23, 1
    %s25 = scalar_select %p24, 0, %s23
    %s26 = sadd.s32 1, %s17
    %s27 = scalar_select %p24, %s26, %s17
    %p28 = scmp.ge.s32.totalorder %s27, 2
    %s29 = scalar_select %p28, 0, %s27
    %s30 = ssub.s32 %s17, %s29
    %s31 = ssub.s32 %s18, %s25
    %s32 = sor.u32 %s30, %s31
    %p33 = scmp.eq.s32.totalorder %s32, 0
    %s35 = sadd.s32 %s34, 1
    %s36 = scalar_select %p33, %s34, %s35
    %p39 = pneg %p33
    %p40 = scmp.eq.s32.totalorder %s10, 1
    %p41 = por %p39, %p40
    %p42 = scmp.ne.s32.totalorder %s34, %s37
    %p43 = scmp.eq.s32.totalorder %s10, 0
    %p44 = por %p42, %p43
    %p45 = scmp.ne.s32.totalorder %s34, %s37
    %p46 = scmp.eq.s32.totalorder %s15, 1
    %p47 = por %p45, %p46
    %p48 = scmp.ne.s32.totalorder %s37, %s38
    %p49 = scmp.eq.s32.totalorder %s15, 0
    %p50 = por %p48, %p49
    %p51 = scmp.ne.s32.totalorder %s37, %s38
    %p52 = scmp.eq.s32.totalorder %s16, 1
    %p53 = por %p51, %p52
    %p55 = scmp.ne.s32.totalorder %s38, %s54
    %p56 = scmp.eq.s32.totalorder %s16, 0
    %p57 = por %p55, %p56
    %s59 = sadd.s32 %s58, 1
    %p62 = scmp.eq.s32.totalorder %s10, 1
    %p63 = scmp.ne.s32.totalorder %s58, %s60
    %p64 = scmp.eq.s32.totalorder %s10, 0
    %p65 = por %p63, %p64
    %p66 = scmp.ne.s32.totalorder %s58, %s60
    %p67 = scmp.eq.s32.totalorder %s15, 1
    %p68 = por %p66, %p67
    %p69 = scmp.ne.s32.totalorder %s60, %s61
    %p70 = scmp.eq.s32.totalorder %s15, 0
    %p71 = por %p69, %p70
    %p72 = scmp.ne.s32.totalorder %s60, %s61
    %p73 = scmp.eq.s32.totalorder %s16, 1
    %p74 = por %p72, %p73
    %p76 = scmp.ne.s32.totalorder %s61, %s75
    %p77 = scmp.eq.s32.totalorder %s16, 0
    %p78 = por %p76, %p77
    %s79 = ssub.s32 %s17, %s29
    %p80 = scmp.eq.s32.totalorder %s79, 0
    %s82 = sadd.s32 %s81, 1
    %s83 = scalar_select %p80, %s81, %s82
    %p86 = pneg %p80
    %p87 = scmp.eq.s32.totalorder %s10, 1
    %p88 = por %p86, %p87
    %p89 = scmp.ne.s32.totalorder %s81, %s84
    %p90 = scmp.eq.s32.totalorder %s10, 0
    %p91 = por %p89, %p90
    %p92 = scmp.ne.s32.totalorder %s81, %s84
    %p93 = scmp.eq.s32.totalorder %s15, 1
    %p94 = por %p92, %p93
    %p95 = scmp.ne.s32.totalorder %s84, %s85
    %p96 = scmp.eq.s32.totalorder %s15, 0
    %p97 = por %p95, %p96
    %p98 = scmp.ne.s32.totalorder %s84, %s85
    %p99 = scmp.eq.s32.totalorder %s16, 1
    %p100 = por %p98, %p99
    %p102 = scmp.ne.s32.totalorder %s85, %s101
    %p103 = scmp.eq.s32.totalorder %s16, 0
    %p104 = por %p102, %p103
    %s105 = ssub.s32 %s17, %s29
    %p106 = scmp.eq.s32.totalorder %s105, 0
    %s108 = sadd.s32 %s107, 1
    %s109 = scalar_select %p106, %s107, %s108
    %p112 = pneg %p106
    %p113 = scmp.eq.s32.totalorder %s10, 1
    %p114 = por %p112, %p113
    %p115 = scmp.ne.s32.totalorder %s107, %s110
    %p116 = scmp.eq.s32.totalorder %s10, 0
    %p117 = por %p115, %p116
    %p118 = scmp.ne.s32.totalorder %s107, %s110
    %p119 = scmp.eq.s32.totalorder %s15, 1
    %p120 = por %p118, %p119
    %p121 = scmp.ne.s32.totalorder %s110, %s111
    %p122 = scmp.eq.s32.totalorder %s15, 0
    %p123 = por %p121, %p122
    %p124 = scmp.ne.s32.totalorder %s110, %s111
    %p125 = scmp.eq.s32.totalorder %s16, 1
    %p126 = por %p124, %p125
    %p128 = scmp.ne.s32.totalorder %s111, %s127
    %p129 = scmp.eq.s32.totalorder %s16, 0
    %p130 = por %p128, %p129
    %p131 = scmp.le.s32.totalorder 1, %s10
    %p132 = scmp.lt.s32.totalorder %s10, 3
    %p133 = pnand %p131, %p132
    %p134 = pneg %p133
    // Predicated region
    $region9: #{head_conv.2} parent=5 // pred_check
      _
    $region10: #{head_conv.2} parent=5 // pred_check_branch
      %136 = sbr.rel (%p133) target = $region12
    $region11: #{head_conv.2} parent=5 // pred_region
      %s137 = ssub.s32 %s10, 1
      // Predicated region
      $region13: #{head_conv.2} parent=11 // pred_check
        %p138 = pneg %p71
      $region14: #{head_conv.2} parent=11 // pred_check_branch
        %140 = sbr.rel (%p138) target = $region16
      $region15: #{head_conv.2} parent=11 // pred_region
        _
      $region16: #{head_conv.2} parent=11 // pred_fallthru
        _
    $region12: #{head_conv.2} parent=5 // pred_fallthru
      _
    %p141 = scmp.lt.s32.totalorder %s10, 2
    // Predicated region
    $region17: #{head_conv.2} parent=5 // pred_check
      %p142 = pneg %p141
    $region18: #{head_conv.2} parent=5 // pred_check_branch
      %144 = sbr.rel (%p142) target = $region20
    $region19: #{head_conv.2} parent=5 // pred_region
      // Predicated region
      $region21: #{head_conv.2} parent=19 // pred_check
        %p145 = pneg %p44
      $region22: #{head_conv.2} parent=19 // pred_check_branch
        %147 = sbr.rel (%p145) target = $region24
      $region23: #{head_conv.2} parent=19 // pred_region
        %p148 = scmp.lt.s32.totalorder %s17, 1
        %s149 = scalar_select %p148, %s17, 1
        %p150 = scmp.lt.s32.totalorder %s18, 0
        %s151 = scalar_select %p150, %s18, 0
        %s152 = smul.addr %s149, 5
        %s153 = sadd.s32 %s151, %s152
        %s154 = smul.addr %s153, 4
        %s155 = scalar_lea.vmem %s0, %s154
      $region24: #{head_conv.2} parent=19 // pred_fallthru
        _
    $region20: #{head_conv.2} parent=5 // pred_fallthru
      _
    %p156 = scmp.le.s32.totalorder 1, %s10
    %p157 = scmp.lt.s32.totalorder %s10, 3
    %p158 = pnand %p156, %p157
    %p159 = pneg %p158
    // Predicated region
    $region25: #{head_conv.2} parent=5 // pred_check
      _
    $region26: #{head_conv.2} parent=5 // pred_check_branch
      %161 = sbr.rel (%p158) target = $region28
    $region27: #{head_conv.2} parent=5 // pred_region
      %s162 = ssub.s32 %s10, 1
      %p163 = scmp.lt.s32.totalorder %s19, 1
      %s164 = scalar_select %p163, %s19, 1
      %p165 = scmp.lt.s32.totalorder %s20, 0
      %s166 = scalar_select %p165, %s20, 0
      %s167 = smul.addr %s164, 5
      %s168 = sadd.s32 %s166, %s167
      %s169 = smul.addr %s168, 4
      %s170 = scalar_lea.vmem %s0, %s169
      %p171 = pneg %p50
      %p172 = pneg %p47
      %p173 = pneg %p71
      %p174 = pneg %p68
      %p175 = pneg %p97
      %p176 = pneg %p94
      %p177 = scmp.lt.s32.totalorder %s19, 1
      %s178 = scalar_select %p177, %s19, 1
      %s179 = smul.addr %s178, 2
      %s180 = smul.addr %s179, 8
      %s181 = scalar_lea.vmem %s2, %s180
      %p182 = pneg %p123
      %p183 = pneg %p120
      %p184 = scmp.lt.s32.totalorder %s19, 1
      %s185 = scalar_select %p184, %s19, 1
      %s186 = smul.addr %s185, 2
      %s187 = smul.addr %s186, 8
      %s188 = scalar_lea.vmem %s3, %s187
      %p189 = scmp.lt.s32.totalorder %s19, 1
      %s190 = scalar_select %p189, %s19, 1
      %p191 = scmp.lt.s32.totalorder %s20, 0
      %s192 = scalar_select %p191, %s20, 0
      %s193 = smul.addr %s190, 5
      %s194 = sadd.s32 %s192, %s193
      %s195 = smul.addr %s194, 4
      %s196 = scalar_lea.vmem %s0, %s195
      %p197 = scmp.lt.s32.totalorder %s19, 1
      %s198 = scalar_select %p197, %s19, 1
      %s199 = smul.addr %s198, 2
      %s200 = smul.addr %s199, 8
      %s201 = scalar_lea.vmem %s2, %s200
      %p202 = scmp.lt.s32.totalorder %s19, 1
      %s203 = scalar_select %p202, %s19, 1
      %s204 = smul.addr %s203, 2
      %s205 = smul.addr %s204, 8
      %s206 = scalar_lea.vmem %s3, %s205
      %v208 = vld [vmem:[%s1] sm:$0xf]
      %v209 = vld [vmem:[%s1 + $0x4] sm:$0xf]
      %v210 = vld [vmem:[%s196] sm:$0xf]
      %v211 = vld [vmem:[%s196 + $0x4] sm:$0xf]
      %v212 = vld [vmem:[%s196 + $0x8] sm:$0xf]
      %v213 = vld [vmem:[%s196 + $0xc] sm:$0xf]
      %v214 = vld [vmem:[%s196 + $0x10] sm:$0x3]
      %v217 = vunpack.c.l.b16 %v208
      %v218 = vunpack.c.l.b16 %v209
      %v219 = vpack.c.b16 %v218, %v217
      %v225 = vunpack.c.l.b16 %v210
      %v226 = vunpack.c.l.b16 %v211
      %v227 = vunpack.c.l.b16 %v212
      %v228 = vunpack.c.l.b16 %v213
      %v229 = vunpack.c.l.b16 %v214
      %v230 = vpack.c.b16 %v226, %v225
      %v231 = vpack.c.b16 %v228, %v227
      %v232 = vpack.c.b16 %v229, %v229
      %vm235 = vcmask 293888
      %v237 = vsel %vm235, %v219, 0
      %vm239 = vcmask 1041408
      %v241 = vsel %vm239, %v232, 0
      %243 = vmatpush.bf16.msra.mxu0 0
      %244 = vmatpush.bf16.msra.mxu0 0
      %245 = vmatpush.bf16.msra.mxu0 0
      %246 = vmatpush.bf16.msra.mxu0 0
      %247 = vmatpush.bf16.msra.mxu0 0
      %248 = vmatpush.bf16.msra.mxu0 %v241
      %249 = vmatpush.bf16.msra.mxu0 %v231
      %250 = vmatpush.bf16.msra.mxu0 %v230
      %251 = vmatmul.bf16.gmra.mxu0 %v237
      %v252 = vpop.f32.mrf.mxu0
      %v253 = vadd.f32 0.0, %v252
      %v254 = vpop.f32.mrf.mxu0
      %v255 = vadd.f32 0.0, %v254
      %256 = vdwg.mxu0
      %p257 = scmp.eq.s32.totalorder %s20, 0
      // Predicated region
      $region29: #{head_conv.2} parent=27 // pred_check
        %p258 = pneg %p257
      $region30: #{head_conv.2} parent=27 // pred_check_branch
        %260 = sbr.rel (%p258) target = $region32
      $region31: #{head_conv.2} parent=27 // pred_region
        %vm261 = vcmask 7168
        %262 = vst.msk [vmem:[%s201] sm:$0xff] %vm261, 0.0
        %263 = vst.msk [vmem:[%s201 + $0x8] sm:$0xff] %vm261, 0.0
        %264 = vst.msk [vmem:[%s206] sm:$0xff] %vm261, 0.0
        %265 = vst.msk [vmem:[%s206 + $0x8] sm:$0xff] %vm261, 0.0
      $region32: #{head_conv.2} parent=27 // pred_fallthru
        _
      %v266 = vld [vmem:[%s201] sm:$0xff]
      %v267 = vld [vmem:[%s201 + $0x8] sm:$0xff]
      %268 = vadd.xlane.f32.xlu0 %v253
      %v269 = vpop.xlane.xlu0 %268
      %270 = vadd.xlane.f32.xlu0 %v255
      %v271 = vpop.xlane.xlu0 %270
      %v272 = vadd.f32 %v266, %v269
      %v273 = vadd.f32 %v267, %v271
      %vm274 = vcmask 7168
      %275 = vst.msk [vmem:[%s201] sm:$0xff] %vm274, %v272
      %276 = vst.msk [vmem:[%s201 + $0x8] sm:$0xff] %vm274, %v273
      %v277 = vld [vmem:[%s206] sm:$0xff]
      %v278 = vld [vmem:[%s206 + $0x8] sm:$0xff]
      %v279 = vmul.f32 %v253, %v253
      %v280 = vmul.f32 %v255, %v255
      %281 = vadd.xlane.f32.xlu0 %v279
      %v282 = vpop.xlane.xlu0 %281
      %283 = vadd.xlane.f32.xlu0 %v280
      %v284 = vpop.xlane.xlu0 %283
      %v285 = vadd.f32 %v277, %v282
      %v286 = vadd.f32 %v278, %v284
      %287 = vst.msk [vmem:[%s206] sm:$0xff] %vm274, %v285
      %288 = vst.msk [vmem:[%s206 + $0x8] sm:$0xff] %vm274, %v286
      %p289 = scmp.lt.s32.totalorder %s19, 1
      %s290 = scalar_select %p289, %s19, 1
      %s291 = smul.addr %s290, 2
      %s292 = smul.addr %s291, 8
      %s293 = scalar_lea.vmem %s2, %s292
      %p294 = scmp.lt.s32.totalorder %s19, 1
      %s295 = scalar_select %p294, %s19, 1
      %s296 = smul.addr %s295, 2
      %s297 = smul.addr %s296, 8
      %s298 = scalar_lea.vmem %s3, %s297
      // Predicated region
      $region33: #{head_conv.2} parent=27 // pred_check
        %p299 = pneg %p94
      $region34: #{head_conv.2} parent=27 // pred_check_branch
        %301 = sbr.rel (%p299) target = $region36
      $region35: #{head_conv.2} parent=27 // pred_region
        _
      $region36: #{head_conv.2} parent=27 // pred_fallthru
        _
      // Predicated region
      $region37: #{head_conv.2} parent=27 // pred_check
        %p302 = pneg %p120
      $region38: #{head_conv.2} parent=27 // pred_check_branch
        %304 = sbr.rel (%p302) target = $region40
      $region39: #{head_conv.2} parent=27 // pred_region
        _
      $region40: #{head_conv.2} parent=27 // pred_fallthru
        _
    $region28: #{head_conv.2} parent=5 // pred_fallthru
      _
    %p305 = scmp.le.s32.totalorder 2, %s10
    // Predicated region
    $region41: #{head_conv.2} parent=5 // pred_check
      %p306 = pneg %p305
    $region42: #{head_conv.2} parent=5 // pred_check_branch
      %308 = sbr.rel (%p306) target = $region44
    $region43: #{head_conv.2} parent=5 // pred_region
      %s309 = ssub.s32 %s10, 2
      // Predicated region
      $region45: #{head_conv.2} parent=43 // pred_check
        %p310 = pneg %p100
      $region46: #{head_conv.2} parent=43 // pred_check_branch
        %312 = sbr.rel (%p310) target = $region48
      $region47: #{head_conv.2} parent=43 // pred_region
        %p313 = scmp.lt.s32.totalorder %s21, 1
        %s314 = scalar_select %p313, %s21, 1
        %s315 = smul.addr %s314, 2
        %s316 = smul.addr %s315, 8
        %s317 = scalar_lea.vmem %s2, %s316
      $region48: #{head_conv.2} parent=43 // pred_fallthru
        _
      // Predicated region
      $region49: #{head_conv.2} parent=43 // pred_check
        %p318 = pneg %p126
      $region50: #{head_conv.2} parent=43 // pred_check_branch
        %320 = sbr.rel (%p318) target = $region52
      $region51: #{head_conv.2} parent=43 // pred_region
        %p321 = scmp.lt.s32.totalorder %s21, 1
        %s322 = scalar_select %p321, %s21, 1
        %s323 = smul.addr %s322, 2
        %s324 = smul.addr %s323, 8
        %s325 = scalar_lea.vmem %s3, %s324
      $region52: #{head_conv.2} parent=43 // pred_fallthru
        _
    $region44: #{head_conv.2} parent=5 // pred_fallthru
      _
  $region6: #{head_conv.2} parent=0 // loop_footer
    %s14 = sadd.s32 1, %s10
  $region7: #{head_conv.2} parent=0 // loop_footer_branch
    %9 = sbr.rel target = $region3
  $region8: #{head_conv.2} parent=0 // loop_exit
    _

// kernel: head_conv.3
$region0: #{head_conv.3}
  #allocation0 [shape = 'u32[]', space=smem, size = 0x4, offset = 0x4, fixed_abs, tag = 'smem constant byte address 0x4 - core index']
  #allocation1 [shape = 'u32[72,128]{1,0:T(1,128)}', space=vmem, size = 0x9000, scoped, tag = 'internal scratch']
  %s0 = inlined_call_operand.vmem [shape: bf16[2,36,128], index: 0, kind: input, shape index: {}]
  %s1 = inlined_call_operand.vmem [shape: bf16[8,36], index: 1, kind: input, shape index: {}]
  %s2 = inlined_call_operand.vmem [shape: f32[8,1], index: 2, kind: input, shape index: {}]
  %s3 = inlined_call_operand.vmem [shape: f32[2,8,128], index: 3, kind: output, shape index: {}]
  %s4 = sld [smem:[#allocation0]]
  $region45: #{head_conv.3} parent=0
    _
  %s6 = ssub.s32 1, %s4
  %s7 = scalar_select 0, %s6, %s4
  loop: start=0, step=1, limit=4
  $region2: #{head_conv.3} parent=0 // loop_pre_header
    _
  $region3: #{head_conv.3} parent=0 // loop_header
    %s9 = sphi 0, %s13
    %p10 = scmp.ge.s32.totalorder %s9, 4
    %s16 = sphi 0, %s28
    %s17 = sphi 0, %s24
    %s18 = sphi 0, %s16
    %s19 = sphi 0, %s17
    %s20 = sphi 0, %s18
    %s21 = sphi 0, %s19
    %s33 = sphi 0, %s35
    %s36 = sphi 0, %s33
    %s37 = sphi 0, %s36
    %s53 = sphi 0, %s37
    %s57 = sphi 0, %s57
    %s59 = sphi 0, %s57
    %s60 = sphi 0, %s59
    %s74 = sphi 0, %s60
    %s78 = sphi 0, %s78
    %s80 = sphi 0, %s78
    %s81 = sphi 0, %s80
    %s95 = sphi 0, %s81
    %s103 = sphi 0, %s105
    %s106 = sphi 0, %s103
    %s107 = sphi 0, %s106
    %s123 = sphi 0, %s107
  $region4: #{head_conv.3} parent=0 // loop_header_branch
    %12 = sbr.rel (%p10) target = $region8
  $region5: #{head_conv.3} parent=0 // loop_body
    %s14 = ssub.s32 %s9, 1
    %s15 = ssub.s32 %s9, 2
    %s22 = sadd.s32 1, %s17
    %p23 = scmp.ge.s32.totalorder %s22, 1
    %s24 = scalar_select %p23, 0, %s22
    %s25 = sadd.s32 1, %s16
    %s26 = scalar_select %p23, %s25, %s16
    %p27 = scmp.ge.s32.totalorder %s26, 2
    %s28 = scalar_select %p27, 0, %s26
    %s29 = ssub.s32 %s16, %s28
    %s30 = ssub.s32 %s17, %s24
    %s31 = sor.u32 %s29, %s30
    %p32 = scmp.eq.s32.totalorder %s31, 0
    %s34 = sadd.s32 %s33, 1
    %s35 = scalar_select %p32, %s33, %s34
    %p38 = pneg %p32
    %p39 = scmp.eq.s32.totalorder %s9, 1
    %p40 = por %p38, %p39
    %p41 = scmp.ne.s32.totalorder %s33, %s36
    %p42 = scmp.eq.s32.totalorder %s9, 0
    %p43 = por %p41, %p42
    %p44 = scmp.ne.s32.totalorder %s33, %s36
    %p45 = scmp.eq.s32.totalorder %s14, 1
    %p46 = por %p44, %p45
    %p47 = scmp.ne.s32.totalorder %s36, %s37
    %p48 = scmp.eq.s32.totalorder %s14, 0
    %p49 = por %p47, %p48
    %p50 = scmp.ne.s32.totalorder %s36, %s37
    %p51 = scmp.eq.s32.totalorder %s15, 1
    %p52 = por %p50, %p51
    %p54 = scmp.ne.s32.totalorder %s37, %s53
    %p55 = scmp.eq.s32.totalorder %s15, 0
    %p56 = por %p54, %p55
    %s58 = sadd.s32 %s57, 1
    %p61 = scmp.eq.s32.totalorder %s9, 1
    %p62 = scmp.ne.s32.totalorder %s57, %s59
    %p63 = scmp.eq.s32.totalorder %s9, 0
    %p64 = por %p62, %p63
    %p65 = scmp.ne.s32.totalorder %s57, %s59
    %p66 = scmp.eq.s32.totalorder %s14, 1
    %p67 = por %p65, %p66
    %p68 = scmp.ne.s32.totalorder %s59, %s60
    %p69 = scmp.eq.s32.totalorder %s14, 0
    %p70 = por %p68, %p69
    %p71 = scmp.ne.s32.totalorder %s59, %s60
    %p72 = scmp.eq.s32.totalorder %s15, 1
    %p73 = por %p71, %p72
    %p75 = scmp.ne.s32.totalorder %s60, %s74
    %p76 = scmp.eq.s32.totalorder %s15, 0
    %p77 = por %p75, %p76
    %s79 = sadd.s32 %s78, 1
    %p82 = scmp.eq.s32.totalorder %s9, 1
    %p83 = scmp.ne.s32.totalorder %s78, %s80
    %p84 = scmp.eq.s32.totalorder %s9, 0
    %p85 = por %p83, %p84
    %p86 = scmp.ne.s32.totalorder %s78, %s80
    %p87 = scmp.eq.s32.totalorder %s14, 1
    %p88 = por %p86, %p87
    %p89 = scmp.ne.s32.totalorder %s80, %s81
    %p90 = scmp.eq.s32.totalorder %s14, 0
    %p91 = por %p89, %p90
    %p92 = scmp.ne.s32.totalorder %s80, %s81
    %p93 = scmp.eq.s32.totalorder %s15, 1
    %p94 = por %p92, %p93
    %p96 = scmp.ne.s32.totalorder %s81, %s95
    %p97 = scmp.eq.s32.totalorder %s15, 0
    %p98 = por %p96, %p97
    %s99 = ssub.s32 %s16, %s28
    %s100 = ssub.s32 %s17, %s24
    %s101 = sor.u32 %s99, %s100
    %p102 = scmp.eq.s32.totalorder %s101, 0
    %s104 = sadd.s32 %s103, 1
    %s105 = scalar_select %p102, %s103, %s104
    %p108 = pneg %p102
    %p109 = scmp.eq.s32.totalorder %s9, 1
    %p110 = por %p108, %p109
    %p111 = scmp.ne.s32.totalorder %s103, %s106
    %p112 = scmp.eq.s32.totalorder %s9, 0
    %p113 = por %p111, %p112
    %p114 = scmp.ne.s32.totalorder %s103, %s106
    %p115 = scmp.eq.s32.totalorder %s14, 1
    %p116 = por %p114, %p115
    %p117 = scmp.ne.s32.totalorder %s106, %s107
    %p118 = scmp.eq.s32.totalorder %s14, 0
    %p119 = por %p117, %p118
    %p120 = scmp.ne.s32.totalorder %s106, %s107
    %p121 = scmp.eq.s32.totalorder %s15, 1
    %p122 = por %p120, %p121
    %p124 = scmp.ne.s32.totalorder %s107, %s123
    %p125 = scmp.eq.s32.totalorder %s15, 0
    %p126 = por %p124, %p125
    %p127 = scmp.le.s32.totalorder 1, %s9
    %p128 = scmp.lt.s32.totalorder %s9, 3
    %p129 = pnand %p127, %p128
    %p130 = pneg %p129
    // Predicated region
    $region9: #{head_conv.3} parent=5 // pred_check
      _
    $region10: #{head_conv.3} parent=5 // pred_check_branch
      %132 = sbr.rel (%p129) target = $region12
    $region11: #{head_conv.3} parent=5 // pred_region
      %s133 = ssub.s32 %s9, 1
      // Predicated region
      $region13: #{head_conv.3} parent=11 // pred_check
        %p134 = pneg %p70
      $region14: #{head_conv.3} parent=11 // pred_check_branch
        %136 = sbr.rel (%p134) target = $region16
      $region15: #{head_conv.3} parent=11 // pred_region
        _
      $region16: #{head_conv.3} parent=11 // pred_fallthru
        _
      // Predicated region
      $region17: #{head_conv.3} parent=11 // pred_check
        %p137 = pneg %p91
      $region18: #{head_conv.3} parent=11 // pred_check_branch
        %139 = sbr.rel (%p137) target = $region20
      $region19: #{head_conv.3} parent=11 // pred_region
        _
      $region20: #{head_conv.3} parent=11 // pred_fallthru
        _
    $region12: #{head_conv.3} parent=5 // pred_fallthru
      _
    %p140 = scmp.lt.s32.totalorder %s9, 2
    // Predicated region
    $region21: #{head_conv.3} parent=5 // pred_check
      %p141 = pneg %p140
    $region22: #{head_conv.3} parent=5 // pred_check_branch
      %143 = sbr.rel (%p141) target = $region24
    $region23: #{head_conv.3} parent=5 // pred_region
      // Predicated region
      $region25: #{head_conv.3} parent=23 // pred_check
        %p144 = pneg %p43
      $region26: #{head_conv.3} parent=23 // pred_check_branch
        %146 = sbr.rel (%p144) target = $region28
      $region27: #{head_conv.3} parent=23 // pred_region
        %p147 = scmp.lt.s32.totalorder %s16, 1
        %s148 = scalar_select %p147, %s16, 1
        %p149 = scmp.lt.s32.totalorder %s17, 0
        %s150 = scalar_select %p149, %s17, 0
        %s151 = smul.addr %s148, 5
        %s152 = sadd.s32 %s150, %s151
        %s153 = smul.addr %s152, 4
        %s154 = scalar_lea.vmem %s0, %s153
      $region28: #{head_conv.3} parent=23 // pred_fallthru
        _
    $region24: #{head_conv.3} parent=5 // pred_fallthru
      _
    %p155 = scmp.le.s32.totalorder 1, %s9
    %p156 = scmp.lt.s32.totalorder %s9, 3
    %p157 = pnand %p155, %p156
    %p158 = pneg %p157
    // Predicated region
    $region29: #{head_conv.3} parent=5 // pred_check
      _
    $region30: #{head_conv.3} parent=5 // pred_check_branch
      %160 = sbr.rel (%p157) target = $region32
    $region31: #{head_conv.3} parent=5 // pred_region
      %s161 = ssub.s32 %s9, 1
      %p162 = scmp.lt.s32.totalorder %s18, 1
      %s163 = scalar_select %p162, %s18, 1
      %p164 = scmp.lt.s32.totalorder %s19, 0
      %s165 = scalar_select %p164, %s19, 0
      %s166 = smul.addr %s163, 5
      %s167 = sadd.s32 %s165, %s166
      %s168 = smul.addr %s167, 4
      %s169 = scalar_lea.vmem %s0, %s168
      %p170 = pneg %p49
      %p171 = pneg %p46
      %p172 = pneg %p70
      %p173 = pneg %p67
      %p174 = pneg %p91
      %p175 = pneg %p88
      %p176 = pneg %p119
      %p177 = pneg %p116
      %p178 = scmp.lt.s32.totalorder %s18, 1
      %s179 = scalar_select %p178, %s18, 1
      %p180 = scmp.lt.s32.totalorder %s19, 0
      %s181 = scalar_select %p180, %s19, 0
      %s182 = sadd.s32 %s181, %s179
      %s183 = smul.addr %s182, 8
      %s184 = scalar_lea.vmem %s3, %s183
      %p185 = scmp.lt.s32.totalorder %s18, 1
      %s186 = scalar_select %p185, %s18, 1
      %p187 = scmp.lt.s32.totalorder %s19, 0
      %s188 = scalar_select %p187, %s19, 0
      %s189 = smul.addr %s186, 5
      %s190 = sadd.s32 %s188, %s189
      %s191 = smul.addr %s190, 4
      %s192 = scalar_lea.vmem %s0, %s191
      %p193 = scmp.lt.s32.totalorder %s18, 1
      %s194 = scalar_select %p193, %s18, 1
      %p195 = scmp.lt.s32.totalorder %s19, 0
      %s196 = scalar_select %p195, %s19, 0
      %s197 = sadd.s32 %s196, %s194
      %s198 = smul.addr %s197, 8
      %s199 = scalar_lea.vmem %s3, %s198
      %v201 = vld [vmem:[%s1] sm:$0xf]
      %v202 = vld [vmem:[%s192] sm:$0xf]
      %v203 = vld [vmem:[%s192 + $0x4] sm:$0xf]
      %v204 = vld [vmem:[%s192 + $0x8] sm:$0xf]
      %v205 = vld [vmem:[%s192 + $0xc] sm:$0xf]
      %v206 = vld [vmem:[%s192 + $0x10] sm:$0x3]
      %v207 = vld [vmem:[%s2] sm:$0xff]
      %209 = vset.pattern.permute.xlu0 0
      %210 = vperm.xlu0 %209, %v207
      %v211 = vpop.permute.xlu0 %210
      %v218 = vunpack.c.l.b16 %v202
      %v219 = vunpack.c.l.b16 %v203
      %v220 = vunpack.c.l.b16 %v204
      %v221 = vunpack.c.l.b16 %v205
      %v222 = vunpack.c.l.b16 %v206
      %v223 = vpack.c.b16 %v219, %v218
      %v224 = vpack.c.b16 %v221, %v220
      %v225 = vpack.c.b16 %v222, %v222
      %vm228 = vcmask 293888
      %v230 = vsel %vm228, %v201, 0
      %vm232 = vcmask 1041408
      %v234 = vsel %vm232, %v225, 0
      %236 = vmatpush.bf16.msra.mxu0 0
      %237 = vmatpush.bf16.msra.mxu0 0
      %238 = vmatpush.bf16.msra.mxu0 0
      %239 = vmatpush.bf16.msra.mxu0 0
      %240 = vmatpush.bf16.msra.mxu0 0
      %241 = vmatpush.bf16.msra.mxu0 %v234
      %242 = vmatpush.bf16.msra.mxu0 %v224
      %243 = vmatpush.bf16.msra.mxu0 %v223
      %244 = vmatmul.bf16.gmra.mxu0 %v230
      %v245 = vpop.f32.mrf.mxu0
      %v246 = vadd.f32 %v211, %v245
      %v247 = vpop.f32.mrf.mxu0
      %248 = vdwg.mxu0
      %vm249 = vcmp.ge.f32.partialorder %v246, 0.0
      %v250 = vmul.f32 %v246, 0.01
      %v251 = vsel %vm249, %v246, %v250
      %252 = vst [vmem:[%s199] sm:$0xff] %v251
      %p253 = scmp.lt.s32.totalorder %s18, 1
      %s254 = scalar_select %p253, %s18, 1
      %p255 = scmp.lt.s32.totalorder %s19, 0
      %s256 = scalar_select %p255, %s19, 0
      %s257 = sadd.s32 %s256, %s254
      %s258 = smul.addr %s257, 8
      %s259 = scalar_lea.vmem %s3, %s258
      // Predicated region
      $region33: #{head_conv.3} parent=31 // pred_check
        %p260 = pneg %p116
      $region34: #{head_conv.3} parent=31 // pred_check_branch
        %262 = sbr.rel (%p260) target = $region36
      $region35: #{head_conv.3} parent=31 // pred_region
        _
      $region36: #{head_conv.3} parent=31 // pred_fallthru
        _
    $region32: #{head_conv.3} parent=5 // pred_fallthru
      _
    %p263 = scmp.le.s32.totalorder 2, %s9
    // Predicated region
    $region37: #{head_conv.3} parent=5 // pred_check
      %p264 = pneg %p263
    $region38: #{head_conv.3} parent=5 // pred_check_branch
      %266 = sbr.rel (%p264) target = $region40
    $region39: #{head_conv.3} parent=5 // pred_region
      %s267 = ssub.s32 %s9, 2
      // Predicated region
      $region41: #{head_conv.3} parent=39 // pred_check
        %p268 = pneg %p122
      $region42: #{head_conv.3} parent=39 // pred_check_branch
        %270 = sbr.rel (%p268) target = $region44
      $region43: #{head_conv.3} parent=39 // pred_region
        %p271 = scmp.lt.s32.totalorder %s20, 1
        %s272 = scalar_select %p271, %s20, 1
        %p273 = scmp.lt.s32.totalorder %s21, 0
        %s274 = scalar_select %p273, %s21, 0
        %s275 = sadd.s32 %s274, %s272
        %s276 = smul.addr %s275, 8
        %s277 = scalar_lea.vmem %s3, %s276
      $region44: #{head_conv.3} parent=39 // pred_fallthru
        _
    $region40: #{head_conv.3} parent=5 // pred_fallthru
      _
  $region6: #{head_conv.3} parent=0 // loop_footer
    %s13 = sadd.s32 1, %s9
  $region7: #{head_conv.3} parent=0 // loop_footer_branch
    %8 = sbr.rel target = $region3
  $region8: #{head_conv.3} parent=0 // loop_exit
    _

</llo_original>
